<compile_context>
chip_gen: v7x
topology: tpu7x:2x2x1
jax: 0.10.0
libtpu: 0.0.40
codegen_flags: <defaults>
</compile_context>

<pallas_src>
import functools
import math

import jax
import jax.numpy as jnp
from jax.experimental import pallas as pl
from jax.experimental.pallas import tpu as pltpu


_SILU_ONE = 1.0 / (1.0 + math.exp(-1.0))     # silu(1.0) = 1 * sigmoid(1)


# ---------------------------------------------------------------------------
# helpers
# ---------------------------------------------------------------------------
def _silu(v):
    return v * jax.nn.sigmoid(v)


def _round_up(n, m):
    return ((n + m - 1) // m) * m


def compute_betas(beta_weights, degree):
    """betas[i] = beta(i-1, i) used in the Gram recursion (i >= 2)."""
    betas = jnp.zeros((degree + 1,), jnp.float32)
    for i in range(2, degree + 1):
        n, m = i - 1, i
        c = ((m + n) * (m - n) * n ** 2) / (m ** 2 / (4.0 * n ** 2 - 1.0))
        betas = betas.at[i].set(c * beta_weights[n])
    return betas


def _vmem_capacity_bytes():
    try:
        info = pltpu.get_tpu_info()
        cap = getattr(info, "vmem_capacity_bytes", None)
        if cap:
            return int(cap)
    except Exception:
        pass
    return 64 * 1024 * 1024                 # conservative (v7x per-TensorCore)


def _choose_tile(N, Din_pad, Dout, degree, in_isz, w_isz, out_isz, tm_max):
    """Pick the lane-tile width tm, the grid step count, and the VMEM limit.

    The per-step working set (double-buffered input/output tiles, resident
    double-buffered fused weights + bias, f32 accumulator, ~4 live recursion
    temporaries) must fit inside the scoped-VMEM limit we request.  The limit
    is clamped to [32, 48] MiB so it is safe on v5e/v6e/v7x alike.
    """
    phys = _vmem_capacity_bytes()
    vmem_limit = max(32 * 1024 * 1024, min(int(phys * 0.7), 48 * 1024 * 1024))

    lane_pad = _round_up(max(Din_pad, 1), 128)
    resident = (2 * (degree + 1) * Dout * lane_pad * w_isz    # fused weights x2
                + 2 * Dout * 128 * 4)                         # P0 bias x2
    per_col = (2 * Din_pad * in_isz          # input tile (double-buffered)
               + 2 * Dout * out_isz          # output tile (double-buffered)
               + 4 * Dout                    # f32 accumulator
               + 4 * Din_pad * 4)            # x, t, p_prev, p_cur (worst-case f32)
    budget = int(vmem_limit * 0.85) - resident
    tm_fit = 128
    if budget > per_col * 128:
        tm_fit = (budget // per_col) // 128 * 128
    tm = max(128, min(tm_max, tm_fit))

    steps = -(-N // tm)
    if N > 128 and steps < 2:
        steps = 2                            # keep both v7x TensorCores busy
    if steps > 1 and steps % 2 == 1:
        steps += 1                           # even split across 2 cores
    tm = _round_up(max(128, -(-N // steps)), 128)
    return tm, steps, vmem_limit


# ---------------------------------------------------------------------------
# Pallas kernel: fused GRAM-KAN layer on one lane-tile of the unfolded input
# ---------------------------------------------------------------------------
def gram_kan_kernel(beta_ref, x_ref, w_ref, bias_ref, o_ref, *,
                    degree, trans_dtype):
    # beta_ref : SMEM (degree+1,) f32            Gram recursion coefficients
    # x_ref    : VMEM (Din_pad, tm)              unfolded patches, N on lanes
    # w_ref    : VMEM (deg+1, Dout, Din_pad)     [base_W, W_1, ..., W_deg]
    # bias_ref : VMEM (Dout, 1) f32              hoisted P0 (== 1) contribution
    # o_ref    : VMEM (Dout, tm)
    mm = w_ref.dtype

    x = x_ref[...].astype(trans_dtype)
    t = jnp.tanh(x)

    # Basis term: silu(x) @ base_W^T  (block 0 of the fused weights).
    acc = jnp.dot(w_ref[0], _silu(x).astype(mm),
                  preferred_element_type=jnp.float32)          # (Dout, tm) f32

    # Gram terms.  P0 == 1 was hoisted into bias_ref; start at P1 = tanh(x).
    # Per-degree dots accumulate into `acc` (no concatenated temp).
    if degree >= 1:
        p_prev = jnp.ones_like(t)                              # P0
        p_cur = t                                              # P1
        acc = acc + jnp.dot(w_ref[1], _silu(p_cur).astype(mm),
                            preferred_element_type=jnp.float32)
        for i in range(2, degree + 1):
            beta = beta_ref[i].astype(trans_dtype)
            p_next = t * p_cur - beta * p_prev
            acc = acc + jnp.dot(w_ref[i], _silu(p_next).astype(mm),
                                preferred_element_type=jnp.float32)
            p_prev, p_cur = p_cur, p_next

    acc = acc + bias_ref[...]                  # (Dout, 1) broadcast over lanes
    # Final activation kept exact in f32.
    o_ref[...] = _silu(acc).astype(o_ref.dtype)


# ---------------------------------------------------------------------------
# wrapper: im2col (already in kernel layout) + pallas_call + fold back
# ---------------------------------------------------------------------------
def _unfold_cols(x, kernel_size, stride, padding, din_pad, dtype):
    """im2col directly into (Din_pad, B*L): Din index order (c, kh, kw)
    matching F.unfold; column index b*L + oh*OW + ow matching the row flatten
    in the PyTorch module.  Built in `dtype` so the K^2-inflated tensor is
    written once in the narrow compute dtype."""
    # TODO(synk): assemble patches in-kernel (pl.ANY input + K*K shifted DMAs)
    # to avoid materializing the K^2-inflated im2col tensor in HBM at all.
    B, C, H, W = x.shape
    K, s, p = kernel_size, stride, padding
    OH = (H + 2 * p - K) // s + 1
    OW = (W + 2 * p - K) // s + 1
    xp = jnp.pad(x.astype(dtype), ((0, 0), (0, 0), (p, p), (p, p)))
    cols = []
    for c in range(C):
        for kh in range(K):
            for kw in range(K):
                cols.append(xp[:, c, kh:kh + s * OH:s, kw:kw + s * OW:s])
    # Zero rows for Din -> Din_pad padding (their weight columns are zero, so
    # the non-zero Gram values P_d(0) for d >= 2 never reach the output).
    zeros = jnp.zeros((B, OH, OW), dtype)
    cols.extend([zeros] * (din_pad - C * K * K))
    return jnp.stack(cols, axis=0).reshape(din_pad, B * OH * OW)


def gram_kan_conv2d(x, params, *, kernel_size, stride, padding, out_channels,
                    degree, tm_max=512, compute_dtype=jnp.bfloat16,
                    transcendental_dtype=None, out_dtype=None):
    """GRAM-KAN conv2d forward.

    compute_dtype:        storage / MXU dtype of patches + weights (bf16 default).
    transcendental_dtype: dtype of the tanh/silu Gram chain; defaults to
                          compute_dtype.  Use jnp.float32 on v5e (no bf16
                          EUP/VPU) or when higher accuracy is required.
    out_dtype:            kernel output dtype (defaults to x.dtype).
    """
    if transcendental_dtype is None:
        transcendental_dtype = compute_dtype
    if out_dtype is None:
        out_dtype = x.dtype

    B, C, H, W = x.shape
    K = kernel_size
    Din = C * K * K
    Dout = out_channels
    Din_pad = _round_up(Din, 8)

    in_isz = jnp.dtype(compute_dtype).itemsize
    w_isz = in_isz
    out_isz = jnp.dtype(out_dtype).itemsize

    OH = (H + 2 * padding - K) // stride + 1
    OW = (W + 2 * padding - K) // stride + 1
    N = B * OH * OW

    tm, steps, vmem_limit = _choose_tile(N, Din_pad, Dout, degree,
                                         in_isz, w_isz, out_isz, tm_max)
    Npad = tm * steps

    cols = _unfold_cols(x, K, stride, padding, Din_pad, compute_dtype)
    cols = jnp.pad(cols, ((0, 0), (0, Npad - N)))            # (Din_pad, Npad)

    # Fused weights: block 0 pairs with silu(x) (base path); block d >= 1 pairs
    # with silu(P_d).  Padded Din columns are zero (keeps zero-padded input
    # rows exact even though P_d(0) != 0 for d >= 2).
    base_w = params["base_weights"]                          # (Dout, Din)
    gram_w = params["grams_basis_weights"]                   # (Din, Dout, deg+1)
    blocks = [base_w.astype(jnp.float32)]
    for d in range(1, degree + 1):
        blocks.append(gram_w[:, :, d].T.astype(jnp.float32))
    w_fused = jnp.stack(blocks, axis=0)                      # (deg+1, Dout, Din)
    w_fused = jnp.pad(w_fused, ((0, 0), (0, 0), (0, Din_pad - Din)))
    w_fused = w_fused.astype(compute_dtype)

    # Hoisted P0 term: silu(P0) = silu(1) is constant -> fixed per-output bias.
    bias0 = (_SILU_ONE * jnp.sum(gram_w[:, :, 0], axis=0))
    bias0 = bias0.reshape(Dout, 1).astype(jnp.float32)

    betas = compute_betas(params["beta_weights"], degree)    # (deg+1,) f32 SMEM

    cost = pl.CostEstimate(
        flops=2 * (degree + 1) * Dout * Din_pad * Npad,
        transcendentals=((degree + 2) * Din_pad + Dout) * Npad,
        bytes_accessed=(Din_pad * Npad * in_isz
                        + (degree + 1) * Dout * Din_pad * w_isz
                        + Dout * 4
                        + Dout * Npad * out_isz),
    )

    out = pl.pallas_call(
        functools.partial(gram_kan_kernel, degree=degree,
                          trans_dtype=transcendental_dtype),
        out_shape=jax.ShapeDtypeStruct((Dout, Npad), out_dtype),
        grid=(steps,),
        in_specs=[
            pl.BlockSpec(memory_space=pltpu.MemorySpace.SMEM),        # betas
            pl.BlockSpec((Din_pad, tm), lambda i: (0, i)),            # patches
            pl.BlockSpec((degree + 1, Dout, Din_pad),
                         lambda i: (0, 0, 0)),                        # weights (resident)
            pl.BlockSpec((Dout, 1), lambda i: (0, 0)),                # P0 bias (resident)
        ],
        out_specs=pl.BlockSpec((Dout, tm), lambda i: (0, i)),         # lane-dense
        compiler_params=pltpu.CompilerParams(
            dimension_semantics=("parallel",),
            vmem_limit_bytes=vmem_limit),
        cost_estimate=cost,
    )(betas, cols, w_fused, bias0)

    out = out[:, :N].reshape(Dout, B, OH, OW)
    # TODO(synk): fold this transpose into the consumer; the lane tile spans
    # batch boundaries so it cannot be expressed as a rectangular out block.
    return jnp.transpose(out, (1, 0, 2, 3))                  # (B, Dout, OH, OW)


# ---------------------------------------------------------------------------
# deterministic parameter init (shapes from GRAMLayer.__init__)
# ---------------------------------------------------------------------------
def init_params(key, in_dim, out_dim, degree):
    k1, k2, k3 = jax.random.split(key, 3)
    std = 1.0 / (in_dim * (degree + 1.0))
    beta_weights = std * jax.random.normal(k1, (degree + 1,), jnp.float32)
    lim = (6.0 / (in_dim + out_dim)) ** 0.5   # xavier-uniform style bound
    grams_basis_weights = jax.random.uniform(
        k2, (in_dim, out_dim, degree + 1), jnp.float32, -lim, lim)
    base_weights = jax.random.uniform(
        k3, (out_dim, in_dim), jnp.float32, -lim, lim)
    return dict(beta_weights=beta_weights,
                grams_basis_weights=grams_basis_weights,
                base_weights=base_weights)


# ---------------------------------------------------------------------------
# pure-JAX reference (independent unfold path, for correctness check)
# ---------------------------------------------------------------------------
def _unfold_nchw_ref(x, kernel_size, stride, padding):
    """Replicates torch.nn.functional.unfold column ordering (c, kh, kw)."""
    B, C, H, W = x.shape
    K, s, p = kernel_size, stride, padding
    OH = (H + 2 * p - K) // s + 1
    OW = (W + 2 * p - K) // s + 1
    xp = jnp.pad(x, ((0, 0), (0, 0), (p, p), (p, p)))
    patches = []
    for kh in range(K):
        for kw in range(K):
            patches.append(xp[:, :, kh:kh + s * OH:s, kw:kw + s * OW:s])
    pat = jnp.stack(patches, axis=2)                 # (B, C, K*K, OH, OW)
    pat = pat.reshape(B, C * K * K, OH * OW)         # (B, C*K*K, L)
    return pat, OH, OW


def reference_forward(x, params, *, kernel_size, stride, padding,
                      out_channels, degree):
    B, C, H, W = x.shape
    x_unf, OH, OW = _unfold_nchw_ref(x, kernel_size, stride, padding)
    rows = jnp.transpose(x_unf, (0, 2, 1)).reshape(B * OH * OW, -1)

    basis = _silu(rows) @ params["base_weights"].T
    t = jnp.tanh(rows)
    betas = compute_betas(params["beta_weights"], degree)
    ps = [jnp.ones_like(t)]
    if degree >= 1:
        ps.append(t)
        for i in range(2, degree + 1):
            ps.append(t * ps[-1] - betas[i] * ps[-2])
    gb = _silu(jnp.stack(ps, axis=-1))                       # (N, Din, deg+1)
    y = jnp.einsum("bld,lod->bo", gb, params["grams_basis_weights"])
    y = _silu(y + basis)

    y = y.reshape(B, OH * OW, out_channels)
    return jnp.transpose(y, (0, 2, 1)).reshape(B, out_channels, OH, OW)


# ---------------------------------------------------------------------------
if __name__ == "__main__":
    key = jax.random.PRNGKey(0)
    kx, kp = jax.random.split(key)

    B, C, H, W = 2, 4, 16, 16
    out_channels, K, stride, padding, degree = 8, 3, 1, 1, 3

    x = jax.random.normal(kx, (B, C, H, W), jnp.float32)
    params = init_params(kp, C * K * K, out_channels, degree)

    ref = reference_forward(x, params, kernel_size=K, stride=stride,
                            padding=padding, out_channels=out_channels,
                            degree=degree)

    OH = (H + 2 * padding - K) // stride + 1
    OW = (W + 2 * padding - K) // stride + 1

    # Exact path: f32 storage + f32 transcendentals (tight tolerance).
    out_f32 = gram_kan_conv2d(
        x, params, kernel_size=K, stride=stride, padding=padding,
        out_channels=out_channels, degree=degree,
        compute_dtype=jnp.float32, transcendental_dtype=jnp.float32)
    out_f32 = jax.block_until_ready(out_f32)
    assert out_f32.shape == (B, out_channels, OH, OW), out_f32.shape
    assert jnp.allclose(out_f32, ref, rtol=1e-4, atol=1e-4), \
        float(jnp.max(jnp.abs(out_f32 - ref)))

    # Default fast path: bf16 storage + bf16 transcendentals (v6e/v7x).
    out_bf16 = gram_kan_conv2d(
        x, params, kernel_size=K, stride=stride, padding=padding,
        out_channels=out_channels, degree=degree)
    out_bf16 = jax.block_until_ready(out_bf16)
    assert out_bf16.shape == (B, out_channels, OH, OW), out_bf16.shape
    rel_err = jnp.max(jnp.abs(out_bf16 - ref) / jnp.maximum(jnp.abs(ref), 1.0))
    # Loose sanity bound for the reduced-precision path (tight check is f32).
    assert float(rel_err) < 0.2, float(rel_err)

    print("KERNEL_OK")
</pallas_src>

<mosaic_0001>
module attributes {stable_mosaic.version = 11 : i64} {
  func.func @gram_kan_kernel(%arg0: i32, %arg1: memref<4xf32, #tpu.memory_space<smem>>, %arg2: memref<40x256xf32, #tpu.memory_space<vmem>>, %arg3: memref<4x8x40xf32, #tpu.memory_space<vmem>>, %arg4: memref<8x1xf32, #tpu.memory_space<vmem>>, %arg5: memref<8x256xf32, #tpu.memory_space<vmem>>) attributes {dimension_semantics = [#tpu.dimension_semantics<parallel>], iteration_bounds = array<i64: 2>, scalar_prefetch = 0 : i64, scratch_operands = 0 : i64, tpu.core_type = #tpu.core_type<tc>, window_params = [{transform_indices = @transform_0, window_bounds = array<i64: 4>}, {transform_indices = @transform_1, window_bounds = array<i64: 40, 256>}, {pipeline_mode = #tpu.pipeline_mode<synchronous>, transform_indices = @transform_2, window_bounds = array<i64: 4, 8, 40>}, {pipeline_mode = #tpu.pipeline_mode<synchronous>, transform_indices = @transform_3, window_bounds = array<i64: 8, 1>}, {transform_indices = @transform_4, window_bounds = array<i64: 8, 256>}]} {
    %c0 = arith.constant 0 : index
    %c0_0 = arith.constant 0 : index
    %0 = vector.load %arg2[%c0, %c0_0] : memref<40x256xf32, #tpu.memory_space<vmem>>, vector<40x256xf32>
    %1 = math.tanh %0 : vector<40x256xf32>
    %c0_1 = arith.constant 0 : index
    %c0_2 = arith.constant 0 : index
    %c0_3 = arith.constant 0 : index
    %2 = vector.load %arg3[%c0_1, %c0_2, %c0_3] : memref<4x8x40xf32, #tpu.memory_space<vmem>>, vector<1x8x40xf32>
    %3 = vector.shape_cast %2 : vector<1x8x40xf32> to vector<8x40xf32>
    %4 = arith.negf %0 : vector<40x256xf32>
    %5 = math.exp %4 : vector<40x256xf32>
    %cst = arith.constant 1.000000e+00 : f32
    %6 = vector.broadcast %cst : f32 to vector<40x256xf32>
    %7 = arith.addf %6, %5 : vector<40x256xf32>
    %8 = arith.divf %6, %7 : vector<40x256xf32>
    %9 = arith.mulf %0, %8 : vector<40x256xf32>
    %cst_4 = arith.constant dense<0.000000e+00> : vector<8x256xf32>
    %10 = tpu.matmul %3, %9, %cst_4 {dimension_numbers = #tpu.dot_dimension_numbers<[1], [0], [0], [1], [0, 0, 1, 1], [], []>} : vector<8x40xf32>, vector<40x256xf32>, vector<8x256xf32> -> vector<8x256xf32>
    %cst_5 = arith.constant 1.000000e+00 : f32
    %11 = vector.broadcast %cst_5 : f32 to vector<40x256xf32>
    %c1 = arith.constant 1 : index
    %c0_6 = arith.constant 0 : index
    %c0_7 = arith.constant 0 : index
    %12 = vector.load %arg3[%c1, %c0_6, %c0_7] : memref<4x8x40xf32, #tpu.memory_space<vmem>>, vector<1x8x40xf32>
    %13 = vector.shape_cast %12 : vector<1x8x40xf32> to vector<8x40xf32>
    %14 = arith.negf %1 : vector<40x256xf32>
    %15 = math.exp %14 : vector<40x256xf32>
    %cst_8 = arith.constant 1.000000e+00 : f32
    %16 = vector.broadcast %cst_8 : f32 to vector<40x256xf32>
    %17 = arith.addf %16, %15 : vector<40x256xf32>
    %18 = arith.divf %16, %17 : vector<40x256xf32>
    %19 = arith.mulf %1, %18 : vector<40x256xf32>
    %cst_9 = arith.constant dense<0.000000e+00> : vector<8x256xf32>
    %20 = tpu.matmul %13, %19, %cst_9 {dimension_numbers = #tpu.dot_dimension_numbers<[1], [0], [0], [1], [0, 0, 1, 1], [], []>} : vector<8x40xf32>, vector<40x256xf32>, vector<8x256xf32> -> vector<8x256xf32>
    %21 = arith.addf %10, %20 : vector<8x256xf32>
    %c2 = arith.constant 2 : index
    %22 = memref.load %arg1[%c2] : memref<4xf32, #tpu.memory_space<smem>>
    %23 = arith.mulf %1, %1 : vector<40x256xf32>
    %24 = vector.broadcast %22 : f32 to vector<40x256xf32>
    %25 = arith.mulf %24, %11 : vector<40x256xf32>
    %26 = arith.subf %23, %25 : vector<40x256xf32>
    %c2_10 = arith.constant 2 : index
    %c0_11 = arith.constant 0 : index
    %c0_12 = arith.constant 0 : index
    %27 = vector.load %arg3[%c2_10, %c0_11, %c0_12] : memref<4x8x40xf32, #tpu.memory_space<vmem>>, vector<1x8x40xf32>
    %28 = vector.shape_cast %27 : vector<1x8x40xf32> to vector<8x40xf32>
    %29 = arith.negf %26 : vector<40x256xf32>
    %30 = math.exp %29 : vector<40x256xf32>
    %cst_13 = arith.constant 1.000000e+00 : f32
    %31 = vector.broadcast %cst_13 : f32 to vector<40x256xf32>
    %32 = arith.addf %31, %30 : vector<40x256xf32>
    %33 = arith.divf %31, %32 : vector<40x256xf32>
    %34 = arith.mulf %26, %33 : vector<40x256xf32>
    %cst_14 = arith.constant dense<0.000000e+00> : vector<8x256xf32>
    %35 = tpu.matmul %28, %34, %cst_14 {dimension_numbers = #tpu.dot_dimension_numbers<[1], [0], [0], [1], [0, 0, 1, 1], [], []>} : vector<8x40xf32>, vector<40x256xf32>, vector<8x256xf32> -> vector<8x256xf32>
    %36 = arith.addf %21, %35 : vector<8x256xf32>
    %c3 = arith.constant 3 : index
    %37 = memref.load %arg1[%c3] : memref<4xf32, #tpu.memory_space<smem>>
    %38 = arith.mulf %1, %26 : vector<40x256xf32>
    %39 = vector.broadcast %37 : f32 to vector<40x256xf32>
    %40 = arith.mulf %39, %1 : vector<40x256xf32>
    %41 = arith.subf %38, %40 : vector<40x256xf32>
    %c3_15 = arith.constant 3 : index
    %c0_16 = arith.constant 0 : index
    %c0_17 = arith.constant 0 : index
    %42 = vector.load %arg3[%c3_15, %c0_16, %c0_17] : memref<4x8x40xf32, #tpu.memory_space<vmem>>, vector<1x8x40xf32>
    %43 = vector.shape_cast %42 : vector<1x8x40xf32> to vector<8x40xf32>
    %44 = arith.negf %41 : vector<40x256xf32>
    %45 = math.exp %44 : vector<40x256xf32>
    %cst_18 = arith.constant 1.000000e+00 : f32
    %46 = vector.broadcast %cst_18 : f32 to vector<40x256xf32>
    %47 = arith.addf %46, %45 : vector<40x256xf32>
    %48 = arith.divf %46, %47 : vector<40x256xf32>
    %49 = arith.mulf %41, %48 : vector<40x256xf32>
    %cst_19 = arith.constant dense<0.000000e+00> : vector<8x256xf32>
    %50 = tpu.matmul %43, %49, %cst_19 {dimension_numbers = #tpu.dot_dimension_numbers<[1], [0], [0], [1], [0, 0, 1, 1], [], []>} : vector<8x40xf32>, vector<40x256xf32>, vector<8x256xf32> -> vector<8x256xf32>
    %51 = arith.addf %36, %50 : vector<8x256xf32>
    %c0_20 = arith.constant 0 : index
    %c0_21 = arith.constant 0 : index
    %52 = vector.load %arg4[%c0_20, %c0_21] : memref<8x1xf32, #tpu.memory_space<vmem>>, vector<8x1xf32>
    %53 = vector.broadcast %52 : vector<8x1xf32> to vector<8x256xf32>
    %54 = arith.addf %51, %53 : vector<8x256xf32>
    %55 = arith.negf %54 : vector<8x256xf32>
    %56 = math.exp %55 : vector<8x256xf32>
    %cst_22 = arith.constant 1.000000e+00 : f32
    %57 = vector.broadcast %cst_22 : f32 to vector<8x256xf32>
    %58 = arith.addf %57, %56 : vector<8x256xf32>
    %59 = arith.divf %57, %58 : vector<8x256xf32>
    %60 = arith.mulf %54, %59 : vector<8x256xf32>
    %c0_23 = arith.constant 0 : index
    %c0_24 = arith.constant 0 : index
    %61 = vector.load %arg5[%c0_23, %c0_24] : memref<8x256xf32, #tpu.memory_space<vmem>>, vector<8x256xf32>
    tpu.vector_store %arg5[%c0_23, %c0_24], %60 {strides = array<i32>} : memref<8x256xf32, #tpu.memory_space<vmem>>, vector<8x256xf32>,
    return
  }
  func.func @transform_0(%arg0: i32) -> i32 {
    %c0_i32 = arith.constant 0 : i32
    %c0_i32_0 = arith.constant 0 : i32
    return %c0_i32 : i32
  }
  func.func @transform_1(%arg0: i32) -> (i32, i32) {
    %c0_i32 = arith.constant 0 : i32
    %c0_i32_0 = arith.constant 0 : i32
    return %c0_i32, %arg0 : i32, i32
  }
  func.func @transform_2(%arg0: i32) -> (i32, i32, i32) {
    %c0_i32 = arith.constant 0 : i32
    %c0_i32_0 = arith.constant 0 : i32
    %c0_i32_1 = arith.constant 0 : i32
    %c0_i32_2 = arith.constant 0 : i32
    return %c0_i32, %c0_i32_0, %c0_i32_1 : i32, i32, i32
  }
  func.func @transform_3(%arg0: i32) -> (i32, i32) {
    %c0_i32 = arith.constant 0 : i32
    %c0_i32_0 = arith.constant 0 : i32
    %c0_i32_1 = arith.constant 0 : i32
    return %c0_i32, %c0_i32_0 : i32, i32
  }
  func.func @transform_4(%arg0: i32) -> (i32, i32) {
    %c0_i32 = arith.constant 0 : i32
    %c0_i32_0 = arith.constant 0 : i32
    return %c0_i32, %arg0 : i32, i32
  }
}

</mosaic_0001>

<llo_original>
// kernel: tpu_custom_call.1
$region0: #{tpu_custom_call.1}
  #allocation0 [shape = 'u32[]', space=smem, size = 0x4, offset = 0x4, fixed_abs, tag = 'smem constant byte address 0x4 - core index']
  #allocation1 [shape = 'u32[144,128]{1,0:T(1,128)}', space=vmem, size = 0x12000, scoped, tag = 'internal scratch']
  %s0 = inlined_call_operand.vmem [shape: f32[4], index: 0, kind: input, shape index: {}]
  %s1 = inlined_call_operand.hbm [shape: f32[40,512], index: 1, kind: input, shape index: {}]
  %s2 = inlined_call_operand.hbm [shape: f32[4,8,40], index: 2, kind: input, shape index: {}]
  %s3 = inlined_call_operand.vmem [shape: f32[8,1], index: 3, kind: input, shape index: {}]
  %s4 = inlined_call_operand.hbm [shape: f32[8,512], index: 4, kind: output, shape index: {}]
  %s5 = sld [smem:[#allocation0]]
  $region61: #{tpu_custom_call.1} parent=0
    _
  %s7 = ssub.s32 1, %s5
  %s8 = scalar_select 0, %s7, %s5
  $region1: #{tpu_custom_call.1} parent=0
    #allocation2 [shape = 'u8[512]{0}', space=smem, size = 0x200, scoped, tag = 'input window, operand 0, single buffered']
    #allocation3 [shape = 's32[2]{0}', space=sflag, size = 0x8, scoped, tag = 'scoped memory for tpu_custom_call.1']
    #allocation4 [shape = 's32[2]{0}', space=sflag, size = 0x8, scoped, tag = 'scoped memory for tpu_custom_call.1']
    #allocation5 [shape = 's32[2]{0}', space=sflag, size = 0x8, scoped, tag = 'scoped memory for tpu_custom_call.1']
    #allocation6 [shape = 'u8[81920]{0}', space=vmem, size = 0x14000, scoped, tag = 'input window, operand 1']
    #allocation7 [shape = 'u8[16384]{0}', space=vmem, size = 0x4000, scoped, tag = 'input window, operand 2, single buffered']
    #allocation8 [shape = 's32[1]{0}', space=sflag, size = 0x4, scoped, tag = 'scoped memory for tpu_custom_call.1']
    #allocation9 [shape = 'u8[16384]{0}', space=vmem, size = 0x4000, scoped, tag = 'output window, operand 0']
    %9 = vsyncpa [#allocation5], 0
    %10 = vsyncpa [#allocation3], 0
    %s11 = scalar_lea.sflag [#allocation3], 1
    %12 = vsyncpa %s11, 0
    %13 = vsyncpa [#allocation8], 0
    %14 = vsyncpa [#allocation4], 0
    %s15 = scalar_lea.sflag [#allocation4], 1
    %16 = vsyncpa %s15, 0
    loop: start=0, step=1, limit=4
    $region2: #{tpu_custom_call.1} parent=1 // loop_pre_header
      _
    $region3: #{tpu_custom_call.1} parent=1 // loop_header
      %s18 = sphi 0, %s22
      %p19 = scmp.ge.s32.totalorder %s18, 4
      %s26 = sphi 0, %s26
      %s28 = sphi 0, %s26
      %s29 = sphi 0, %s28
      %s43 = sphi 0, %s29
      %s49 = sphi 0, %s51
      %s52 = sphi 0, %s49
      %s53 = sphi 0, %s52
      %s69 = sphi 0, %s53
      %s73 = sphi 0, %s73
      %s75 = sphi 0, %s73
      %s76 = sphi 0, %s75
      %s90 = sphi 0, %s76
      %s94 = sphi 0, %s94
      %s96 = sphi 0, %s94
      %s97 = sphi 0, %s96
      %s111 = sphi 0, %s97
      %s117 = sphi 0, %s119
      %s120 = sphi 0, %s117
      %s121 = sphi 0, %s120
      %s137 = sphi 0, %s121
    $region4: #{tpu_custom_call.1} parent=1 // loop_header_branch
      %21 = sbr.rel (%p19) target = $region8
    $region5: #{tpu_custom_call.1} parent=1 // loop_body
      %s23 = ssub.s32 %s18, 1
      %s24 = ssub.s32 %s18, 2
      %s25 = sadd.s32 %s18, 1
      %s27 = sadd.s32 %s26, 1
      %p30 = scmp.eq.s32.totalorder %s18, 1
      %p31 = scmp.ne.s32.totalorder %s26, %s28
      %p32 = scmp.eq.s32.totalorder %s18, 0
      %p33 = por %p31, %p32
      %p34 = scmp.ne.s32.totalorder %s26, %s28
      %p35 = scmp.eq.s32.totalorder %s23, 1
      %p36 = por %p34, %p35
      %p37 = scmp.ne.s32.totalorder %s28, %s29
      %p38 = scmp.eq.s32.totalorder %s23, 0
      %p39 = por %p37, %p38
      %p40 = scmp.ne.s32.totalorder %s28, %s29
      %p41 = scmp.eq.s32.totalorder %s24, 1
      %p42 = por %p40, %p41
      %p44 = scmp.ne.s32.totalorder %s29, %s43
      %p45 = scmp.eq.s32.totalorder %s24, 0
      %p46 = por %p44, %p45
      %s47 = ssub.s32 %s18, %s25
      %p48 = scmp.eq.s32.totalorder %s47, 0
      %s50 = sadd.s32 %s49, 1
      %s51 = scalar_select %p48, %s49, %s50
      %p54 = pneg %p48
      %p55 = scmp.eq.s32.totalorder %s18, 1
      %p56 = por %p54, %p55
      %p57 = scmp.ne.s32.totalorder %s49, %s52
      %p58 = scmp.eq.s32.totalorder %s18, 0
      %p59 = por %p57, %p58
      %p60 = scmp.ne.s32.totalorder %s49, %s52
      %p61 = scmp.eq.s32.totalorder %s23, 1
      %p62 = por %p60, %p61
      %p63 = scmp.ne.s32.totalorder %s52, %s53
      %p64 = scmp.eq.s32.totalorder %s23, 0
      %p65 = por %p63, %p64
      %p66 = scmp.ne.s32.totalorder %s52, %s53
      %p67 = scmp.eq.s32.totalorder %s24, 1
      %p68 = por %p66, %p67
      %p70 = scmp.ne.s32.totalorder %s53, %s69
      %p71 = scmp.eq.s32.totalorder %s24, 0
      %p72 = por %p70, %p71
      %s74 = sadd.s32 %s73, 1
      %p77 = scmp.eq.s32.totalorder %s18, 1
      %p78 = scmp.ne.s32.totalorder %s73, %s75
      %p79 = scmp.eq.s32.totalorder %s18, 0
      %p80 = por %p78, %p79
      %p81 = scmp.ne.s32.totalorder %s73, %s75
      %p82 = scmp.eq.s32.totalorder %s23, 1
      %p83 = por %p81, %p82
      %p84 = scmp.ne.s32.totalorder %s75, %s76
      %p85 = scmp.eq.s32.totalorder %s23, 0
      %p86 = por %p84, %p85
      %p87 = scmp.ne.s32.totalorder %s75, %s76
      %p88 = scmp.eq.s32.totalorder %s24, 1
      %p89 = por %p87, %p88
      %p91 = scmp.ne.s32.totalorder %s76, %s90
      %p92 = scmp.eq.s32.totalorder %s24, 0
      %p93 = por %p91, %p92
      %s95 = sadd.s32 %s94, 1
      %p98 = scmp.eq.s32.totalorder %s18, 1
      %p99 = scmp.ne.s32.totalorder %s94, %s96
      %p100 = scmp.eq.s32.totalorder %s18, 0
      %p101 = por %p99, %p100
      %p102 = scmp.ne.s32.totalorder %s94, %s96
      %p103 = scmp.eq.s32.totalorder %s23, 1
      %p104 = por %p102, %p103
      %p105 = scmp.ne.s32.totalorder %s96, %s97
      %p106 = scmp.eq.s32.totalorder %s23, 0
      %p107 = por %p105, %p106
      %p108 = scmp.ne.s32.totalorder %s96, %s97
      %p109 = scmp.eq.s32.totalorder %s24, 1
      %p110 = por %p108, %p109
      %p112 = scmp.ne.s32.totalorder %s97, %s111
      %p113 = scmp.eq.s32.totalorder %s24, 0
      %p114 = por %p112, %p113
      %s115 = ssub.s32 %s18, %s25
      %p116 = scmp.eq.s32.totalorder %s115, 0
      %s118 = sadd.s32 %s117, 1
      %s119 = scalar_select %p116, %s117, %s118
      %p122 = pneg %p116
      %p123 = scmp.eq.s32.totalorder %s18, 1
      %p124 = por %p122, %p123
      %p125 = scmp.ne.s32.totalorder %s117, %s120
      %p126 = scmp.eq.s32.totalorder %s18, 0
      %p127 = por %p125, %p126
      %p128 = scmp.ne.s32.totalorder %s117, %s120
      %p129 = scmp.eq.s32.totalorder %s23, 1
      %p130 = por %p128, %p129
      %p131 = scmp.ne.s32.totalorder %s120, %s121
      %p132 = scmp.eq.s32.totalorder %s23, 0
      %p133 = por %p131, %p132
      %p134 = scmp.ne.s32.totalorder %s120, %s121
      %p135 = scmp.eq.s32.totalorder %s24, 1
      %p136 = por %p134, %p135
      %p138 = scmp.ne.s32.totalorder %s121, %s137
      %p139 = scmp.eq.s32.totalorder %s24, 0
      %p140 = por %p138, %p139
      %p141 = scmp.le.s32.totalorder 1, %s18
      %p142 = scmp.lt.s32.totalorder %s18, 3
      %p143 = pnand %p141, %p142
      %p144 = pneg %p143
      // Predicated region
      $region9: #{tpu_custom_call.1} parent=5 // pred_check
        _
      $region10: #{tpu_custom_call.1} parent=5 // pred_check_branch
        %146 = sbr.rel (%p143) target = $region12
      $region11: #{tpu_custom_call.1} parent=5 // pred_region
        %s147 = ssub.s32 %s18, 1
        // Predicated region
        $region13: #{tpu_custom_call.1} parent=11 // pred_check
          %p148 = pneg %p39
        $region14: #{tpu_custom_call.1} parent=11 // pred_check_branch
          %150 = sbr.rel (%p148) target = $region16
        $region15: #{tpu_custom_call.1} parent=11 // pred_region
          %s152 = ssub.s32 16, 16
          %153 = vsyncadd [#allocation5], %s152
          %s155 = sshll.u32 %s0, 4
          %s156 = int_to_ptr.vmem [resolvable:$true] %s155
          %158 = dma.vmem_to_smem %s156, 16, [#allocation2], [#allocation5]
        $region16: #{tpu_custom_call.1} parent=11 // pred_fallthru
          _
        // Predicated region
        $region17: #{tpu_custom_call.1} parent=11 // pred_check
          %p159 = pneg %p86
        $region18: #{tpu_custom_call.1} parent=11 // pred_check_branch
          %161 = sbr.rel (%p159) target = $region20
        $region19: #{tpu_custom_call.1} parent=11 // pred_region
          %s163 = ssub.s32 512, 512
          %164 = vsyncadd [#allocation8], %s163
          %s165 = sshll.u32 [#allocation7], 4
          %s166 = int_to_ptr.vmem [resolvable:$true] %s165
          %171 = dma.hbm_to_vmem [thread:$0]  %s2, 512, %s166, [#allocation8], 128, 128, 8
        $region20: #{tpu_custom_call.1} parent=11 // pred_fallthru
          _
        // Predicated region
        $region21: #{tpu_custom_call.1} parent=11 // pred_check
          %p172 = pneg %p107
        $region22: #{tpu_custom_call.1} parent=11 // pred_check_branch
          %174 = sbr.rel (%p172) target = $region24
        $region23: #{tpu_custom_call.1} parent=11 // pred_region
          _
        $region24: #{tpu_custom_call.1} parent=11 // pred_fallthru
          _
      $region12: #{tpu_custom_call.1} parent=5 // pred_fallthru
        _
      %p175 = scmp.lt.s32.totalorder %s18, 2
      // Predicated region
      $region25: #{tpu_custom_call.1} parent=5 // pred_check
        %p176 = pneg %p175
      $region26: #{tpu_custom_call.1} parent=5 // pred_check_branch
        %178 = sbr.rel (%p176) target = $region28
      $region27: #{tpu_custom_call.1} parent=5 // pred_region
        // Predicated region
        $region29: #{tpu_custom_call.1} parent=27 // pred_check
          %p179 = pneg %p59
        $region30: #{tpu_custom_call.1} parent=27 // pred_check_branch
          %181 = sbr.rel (%p179) target = $region32
        $region31: #{tpu_custom_call.1} parent=27 // pred_region
          %s182 = sand.u32 %s49, 1
          %s183 = scalar_lea.sflag [#allocation3], %s182
          %s184 = sand.u32 %s49, 1
          %s185 = smul.addr %s184, 80
          %s186 = scalar_lea.vmem [#allocation6], %s185
          %s187 = smul.u32 2, %s18
          %s189 = ssub.s32 1280, 1280
          %190 = vsyncadd %s183, %s189
          %s191 = smul.addr %s187, 128
          %s192 = scalar_lea.hbm %s1, %s191
          %s193 = sshll.u32 %s186, 4
          %s194 = int_to_ptr.vmem [resolvable:$true] %s193
          %199 = dma.hbm_to_vmem [thread:$0]  %s192, 1280, %s194, %s183, 512, 256, 16
        $region32: #{tpu_custom_call.1} parent=27 // pred_fallthru
          _
      $region28: #{tpu_custom_call.1} parent=5 // pred_fallthru
        _
      %p200 = scmp.le.s32.totalorder 1, %s18
      %p201 = scmp.lt.s32.totalorder %s18, 3
      %p202 = pnand %p200, %p201
      %p203 = pneg %p202
      // Predicated region
      $region33: #{tpu_custom_call.1} parent=5 // pred_check
        _
      $region34: #{tpu_custom_call.1} parent=5 // pred_check_branch
        %205 = sbr.rel (%p202) target = $region36
      $region35: #{tpu_custom_call.1} parent=5 // pred_region
        %s206 = ssub.s32 %s18, 1
        // Predicated region
        $region37: #{tpu_custom_call.1} parent=35 // pred_check
          %p207 = pneg %p39
        $region38: #{tpu_custom_call.1} parent=35 // pred_check_branch
          %209 = sbr.rel (%p207) target = $region40
        $region39: #{tpu_custom_call.1} parent=35 // pred_region
          %210 = dma.done [#allocation5], 16
        $region40: #{tpu_custom_call.1} parent=35 // pred_fallthru
          _
        %s211 = sand.u32 %s52, 1
        %s212 = scalar_lea.sflag [#allocation3], %s211
        %s213 = sand.u32 %s52, 1
        %s214 = smul.addr %s213, 80
        %s215 = scalar_lea.vmem [#allocation6], %s214
        // Predicated region
        $region41: #{tpu_custom_call.1} parent=35 // pred_check
          %p216 = pneg %p65
        $region42: #{tpu_custom_call.1} parent=35 // pred_check_branch
          %218 = sbr.rel (%p216) target = $region44
        $region43: #{tpu_custom_call.1} parent=35 // pred_region
          %219 = dma.done %s212, 1280
        $region44: #{tpu_custom_call.1} parent=35 // pred_fallthru
          _
        // Predicated region
        $region45: #{tpu_custom_call.1} parent=35 // pred_check
          %p220 = pneg %p86
        $region46: #{tpu_custom_call.1} parent=35 // pred_check_branch
          %222 = sbr.rel (%p220) target = $region48
        $region47: #{tpu_custom_call.1} parent=35 // pred_region
          %223 = dma.done [#allocation8], 512
        $region48: #{tpu_custom_call.1} parent=35 // pred_fallthru
          _
        %224 = sfence
        %p225 = pneg %p39
        %p226 = pneg %p36
        %s227 = sand.u32 %s52, 1
        %s228 = scalar_lea.sflag [#allocation3], %s227
        %s229 = sand.u32 %s52, 1
        %s230 = smul.addr %s229, 80
        %s231 = scalar_lea.vmem [#allocation6], %s230
        %p232 = pneg %p65
        %p233 = pneg %p62
        %p234 = pneg %p86
        %p235 = pneg %p83
        %p236 = pneg %p107
        %p237 = pneg %p104
        %p238 = pneg %p133
        %p239 = pneg %p130
        %s240 = sand.u32 %s120, 1
        %s241 = scalar_lea.sflag [#allocation4], %s240
        %s242 = sand.u32 %s120, 1
        %s243 = smul.addr %s242, 16
        %s244 = scalar_lea.vmem [#allocation9], %s243
        %s245 = smul.u32 2, %s23
        %s246 = smul.u32 2, %s23
        %v247 = vld [vmem:[%s215] sm:$0xff]
        %v248 = vld [vmem:[%s215 + $0x8] sm:$0xff]
        %v249 = vld [vmem:[%s215 + $0x10] sm:$0xff]
        %v250 = vld [vmem:[%s215 + $0x18] sm:$0xff]
        %v251 = vld [vmem:[%s215 + $0x20] sm:$0xff]
        %v252 = vld [vmem:[%s215 + $0x28] sm:$0xff]
        %v253 = vld [vmem:[%s215 + $0x30] sm:$0xff]
        %v254 = vld [vmem:[%s215 + $0x38] sm:$0xff]
        %v255 = vld [vmem:[%s215 + $0x40] sm:$0xff]
        %v256 = vld [vmem:[%s215 + $0x48] sm:$0xff]
        %v257 = vtanh.pop %v247
        %v258 = vtanh.pop %v248
        %v259 = vtanh.pop %v249
        %v260 = vtanh.pop %v250
        %v261 = vtanh.pop %v251
        %v262 = vtanh.pop %v252
        %v263 = vtanh.pop %v253
        %v264 = vtanh.pop %v254
        %v265 = vtanh.pop %v255
        %v266 = vtanh.pop %v256
        %v267 = vld [vmem:[#allocation7] sm:$0xff]
        %v268 = vxor.u32 %v247, 2147483648
        %v269 = vxor.u32 %v248, 2147483648
        %v270 = vxor.u32 %v249, 2147483648
        %v271 = vxor.u32 %v250, 2147483648
        %v272 = vxor.u32 %v251, 2147483648
        %v273 = vxor.u32 %v252, 2147483648
        %v274 = vxor.u32 %v253, 2147483648
        %v275 = vxor.u32 %v254, 2147483648
        %v276 = vxor.u32 %v255, 2147483648
        %v277 = vxor.u32 %v256, 2147483648
        %v278 = vmul.f32 %v268, 1.442695
        %v279 = vpow.pop %v278
        %v280 = vmul.f32 %v269, 1.442695
        %v281 = vpow.pop %v280
        %v282 = vmul.f32 %v270, 1.442695
        %v283 = vpow.pop %v282
        %v284 = vmul.f32 %v271, 1.442695
        %v285 = vpow.pop %v284
        %v286 = vmul.f32 %v272, 1.442695
        %v287 = vpow.pop %v286
        %v288 = vmul.f32 %v273, 1.442695
        %v289 = vpow.pop %v288
        %v290 = vmul.f32 %v274, 1.442695
        %v291 = vpow.pop %v290
        %v292 = vmul.f32 %v275, 1.442695
        %v293 = vpow.pop %v292
        %v294 = vmul.f32 %v276, 1.442695
        %v295 = vpow.pop %v294
        %v296 = vmul.f32 %v277, 1.442695
        %v297 = vpow.pop %v296
        %v298 = vadd.f32 %v279, 1.0
        %v299 = vadd.f32 %v281, 1.0
        %v300 = vadd.f32 %v283, 1.0
        %v301 = vadd.f32 %v285, 1.0
        %v302 = vadd.f32 %v287, 1.0
        %v303 = vadd.f32 %v289, 1.0
        %v304 = vadd.f32 %v291, 1.0
        %v305 = vadd.f32 %v293, 1.0
        %v306 = vadd.f32 %v295, 1.0
        %v307 = vadd.f32 %v297, 1.0
        %v308 = vrcp.pop %v298
        %v309 = vmul.f32 1.0, %v308
        %v310 = vrcp.pop %v299
        %v311 = vmul.f32 1.0, %v310
        %v312 = vrcp.pop %v300
        %v313 = vmul.f32 1.0, %v312
        %v314 = vrcp.pop %v301
        %v315 = vmul.f32 1.0, %v314
        %v316 = vrcp.pop %v302
        %v317 = vmul.f32 1.0, %v316
        %v318 = vrcp.pop %v303
        %v319 = vmul.f32 1.0, %v318
        %v320 = vrcp.pop %v304
        %v321 = vmul.f32 1.0, %v320
        %v322 = vrcp.pop %v305
        %v323 = vmul.f32 1.0, %v322
        %v324 = vrcp.pop %v306
        %v325 = vmul.f32 1.0, %v324
        %v326 = vrcp.pop %v307
        %v327 = vmul.f32 1.0, %v326
        %v328 = vmul.f32 %v247, %v309
        %v329 = vmul.f32 %v248, %v311
        %v330 = vmul.f32 %v249, %v313
        %v331 = vmul.f32 %v250, %v315
        %v332 = vmul.f32 %v251, %v317
        %v333 = vmul.f32 %v252, %v319
        %v334 = vmul.f32 %v253, %v321
        %v335 = vmul.f32 %v254, %v323
        %v336 = vmul.f32 %v255, %v325
        %v337 = vmul.f32 %v256, %v327
        %s338 = scalar_lea.vmem [#allocation7], 8
        %v339 = vld [vmem:[%s338] sm:$0xff]
        %v340 = vxor.u32 %v257, 2147483648
        %v341 = vxor.u32 %v258, 2147483648
        %v342 = vxor.u32 %v259, 2147483648
        %v343 = vxor.u32 %v260, 2147483648
        %v344 = vxor.u32 %v261, 2147483648
        %v345 = vxor.u32 %v262, 2147483648
        %v346 = vxor.u32 %v263, 2147483648
        %v347 = vxor.u32 %v264, 2147483648
        %v348 = vxor.u32 %v265, 2147483648
        %v349 = vxor.u32 %v266, 2147483648
        %v350 = vmul.f32 %v340, 1.442695
        %v351 = vpow.pop %v350
        %v352 = vmul.f32 %v341, 1.442695
        %v353 = vpow.pop %v352
        %v354 = vmul.f32 %v342, 1.442695
        %v355 = vpow.pop %v354
        %v356 = vmul.f32 %v343, 1.442695
        %v357 = vpow.pop %v356
        %v358 = vmul.f32 %v344, 1.442695
        %v359 = vpow.pop %v358
        %v360 = vmul.f32 %v345, 1.442695
        %v361 = vpow.pop %v360
        %v362 = vmul.f32 %v346, 1.442695
        %v363 = vpow.pop %v362
        %v364 = vmul.f32 %v347, 1.442695
        %v365 = vpow.pop %v364
        %v366 = vmul.f32 %v348, 1.442695
        %v367 = vpow.pop %v366
        %v368 = vmul.f32 %v349, 1.442695
        %v369 = vpow.pop %v368
        %v370 = vadd.f32 %v351, 1.0
        %v371 = vadd.f32 %v353, 1.0
        %v372 = vadd.f32 %v355, 1.0
        %v373 = vadd.f32 %v357, 1.0
        %v374 = vadd.f32 %v359, 1.0
        %v375 = vadd.f32 %v361, 1.0
        %v376 = vadd.f32 %v363, 1.0
        %v377 = vadd.f32 %v365, 1.0
        %v378 = vadd.f32 %v367, 1.0
        %v379 = vadd.f32 %v369, 1.0
        %v380 = vrcp.pop %v370
        %v381 = vmul.f32 1.0, %v380
        %v382 = vrcp.pop %v371
        %v383 = vmul.f32 1.0, %v382
        %v384 = vrcp.pop %v372
        %v385 = vmul.f32 1.0, %v384
        %v386 = vrcp.pop %v373
        %v387 = vmul.f32 1.0, %v386
        %v388 = vrcp.pop %v374
        %v389 = vmul.f32 1.0, %v388
        %v390 = vrcp.pop %v375
        %v391 = vmul.f32 1.0, %v390
        %v392 = vrcp.pop %v376
        %v393 = vmul.f32 1.0, %v392
        %v394 = vrcp.pop %v377
        %v395 = vmul.f32 1.0, %v394
        %v396 = vrcp.pop %v378
        %v397 = vmul.f32 1.0, %v396
        %v398 = vrcp.pop %v379
        %v399 = vmul.f32 1.0, %v398
        %v400 = vmul.f32 %v257, %v381
        %v401 = vmul.f32 %v258, %v383
        %v402 = vmul.f32 %v259, %v385
        %v403 = vmul.f32 %v260, %v387
        %v404 = vmul.f32 %v261, %v389
        %v405 = vmul.f32 %v262, %v391
        %v406 = vmul.f32 %v263, %v393
        %v407 = vmul.f32 %v264, %v395
        %v408 = vmul.f32 %v265, %v397
        %v409 = vmul.f32 %v266, %v399
        %vm410 = vcmask 326656
        %v412 = vsel %vm410, %v339, 0
        %414 = vmatprep.subr.mxu0 %v401
        %415 = vmatpush1.msra.mxu0 %v400
        %416 = vmatprep.subr.mxu0 %v403
        %417 = vmatpush1.msra.mxu0 %v402
        %418 = vmatprep.subr.mxu0 %v405
        %419 = vmatpush1.msra.mxu0 %v404
        %420 = vmatprep.subr.mxu0 %v407
        %421 = vmatpush1.msra.mxu0 %v406
        %422 = vmatprep.subr.mxu0 %v409
        %423 = vmatpush1.msra.mxu0 %v408
        %424 = vmatprep.subr.mxu0 0.0
        %425 = vmatpush1.msra.mxu0 0.0
        %426 = vmatprep.subr.mxu0 0.0
        %427 = vmatpush1.msra.mxu0 0.0
        %428 = vmatprep.subr.mxu0 0.0
        %429 = vmatpush1.msra.mxu0 0.0
        %430 = vmatprep.subr.mxu0 0.0
        %431 = vmatpush1.msra.mxu0 0.0
        %432 = vmatprep.subr.mxu0 0.0
        %433 = vmatpush1.msra.mxu0 0.0
        %434 = vmatprep.subr.mxu0 0.0
        %435 = vmatpush1.msra.mxu0 0.0
        %436 = vmatprep.subr.mxu0 0.0
        %437 = vmatpush1.msra.mxu0 0.0
        %438 = vmatprep.subr.mxu0 0.0
        %439 = vmatpush1.msra.mxu0 0.0
        %440 = vmatprep.subr.mxu0 0.0
        %441 = vmatpush1.msra.mxu0 0.0
        %442 = vmatprep.subr.mxu0 0.0
        %443 = vmatpush1.msra.mxu0 0.0
        %444 = vmatprep.subr.mxu0 0.0
        %445 = vmatpush1.msra.mxu0 0.0
        %446 = vmatprep.subr.mxu0 0.0
        %447 = vmatpush1.msra.mxu0 0.0
        %448 = vmatprep.subr.mxu0 0.0
        %449 = vmatpush1.msra.mxu0 0.0
        %450 = vmatprep.subr.mxu0 0.0
        %451 = vmatpush1.msra.mxu0 0.0
        %452 = vmatprep.subr.mxu0 0.0
        %453 = vmatpush1.msra.mxu0 0.0
        %454 = vmatprep.subr.mxu0 0.0
        %455 = vmatpush1.msra.mxu0 0.0
        %456 = vmatprep.subr.mxu0 0.0
        %457 = vmatpush1.msra.mxu0 0.0
        %458 = vmatprep.subr.mxu0 0.0
        %459 = vmatpush1.msra.mxu0 0.0
        %460 = vmatprep.subr.mxu0 0.0
        %461 = vmatpush1.msra.mxu0 0.0
        %462 = vmatprep.subr.mxu0 0.0
        %463 = vmatpush1.msra.mxu0 0.0
        %464 = vmatprep.subr.mxu0 0.0
        %465 = vmatpush1.msra.mxu0 0.0
        %466 = vmatprep.subr.mxu0 0.0
        %467 = vmatpush1.msra.mxu0 0.0
        %468 = vmatprep.subr.mxu0 0.0
        %469 = vmatpush1.msra.mxu0 0.0
        %470 = vmatprep.subr.mxu0 0.0
        %471 = vmatpush1.msra.mxu0 0.0
        %472 = vmatprep.subr.mxu0 0.0
        %473 = vmatpush1.msra.mxu0 0.0
        %474 = vmatprep.subr.mxu0 0.0
        %475 = vmatpush1.msra.mxu0 0.0
        %476 = vmatprep.subr.mxu0 0.0
        %477 = vmatpush1.msra.mxu0 0.0
        %478 = vmatprep.mubr.f32.mxu0 0.0
        %479 = vmatmul.mubr.f32.gmra.mrb[0].mxu0 %v412
        %v480 = vpop.f32.mrb[0].mxu0
        %v481 = vadd.f32 0.0, %v480
        %v482 = vpop.f32.mrb[0].mxu0
        %v483 = vadd.f32 0.0, %v482
        %484 = vdwg.mxu0
        %v486 = vsel %vm410, %v267, 0
        %488 = vmatprep.subr.mxu0 %v329
        %489 = vmatpush1.msra.mxu0 %v328
        %490 = vmatprep.subr.mxu0 %v331
        %491 = vmatpush1.msra.mxu0 %v330
        %492 = vmatprep.subr.mxu0 %v333
        %493 = vmatpush1.msra.mxu0 %v332
        %494 = vmatprep.subr.mxu0 %v335
        %495 = vmatpush1.msra.mxu0 %v334
        %496 = vmatprep.subr.mxu0 %v337
        %497 = vmatpush1.msra.mxu0 %v336
        %498 = vmatprep.subr.mxu0 0.0
        %499 = vmatpush1.msra.mxu0 0.0
        %500 = vmatprep.subr.mxu0 0.0
        %501 = vmatpush1.msra.mxu0 0.0
        %502 = vmatprep.subr.mxu0 0.0
        %503 = vmatpush1.msra.mxu0 0.0
        %504 = vmatprep.subr.mxu0 0.0
        %505 = vmatpush1.msra.mxu0 0.0
        %506 = vmatprep.subr.mxu0 0.0
        %507 = vmatpush1.msra.mxu0 0.0
        %508 = vmatprep.subr.mxu0 0.0
        %509 = vmatpush1.msra.mxu0 0.0
        %510 = vmatprep.subr.mxu0 0.0
        %511 = vmatpush1.msra.mxu0 0.0
        %512 = vmatprep.subr.mxu0 0.0
        %513 = vmatpush1.msra.mxu0 0.0
        %514 = vmatprep.subr.mxu0 0.0
        %515 = vmatpush1.msra.mxu0 0.0
        %516 = vmatprep.subr.mxu0 0.0
        %517 = vmatpush1.msra.mxu0 0.0
        %518 = vmatprep.subr.mxu0 0.0
        %519 = vmatpush1.msra.mxu0 0.0
        %520 = vmatprep.subr.mxu0 0.0
        %521 = vmatpush1.msra.mxu0 0.0
        %522 = vmatprep.subr.mxu0 0.0
        %523 = vmatpush1.msra.mxu0 0.0
        %524 = vmatprep.subr.mxu0 0.0
        %525 = vmatpush1.msra.mxu0 0.0
        %526 = vmatprep.subr.mxu0 0.0
        %527 = vmatpush1.msra.mxu0 0.0
        %528 = vmatprep.subr.mxu0 0.0
        %529 = vmatpush1.msra.mxu0 0.0
        %530 = vmatprep.subr.mxu0 0.0
        %531 = vmatpush1.msra.mxu0 0.0
        %532 = vmatprep.subr.mxu0 0.0
        %533 = vmatpush1.msra.mxu0 0.0
        %534 = vmatprep.subr.mxu0 0.0
        %535 = vmatpush1.msra.mxu0 0.0
        %536 = vmatprep.subr.mxu0 0.0
        %537 = vmatpush1.msra.mxu0 0.0
        %538 = vmatprep.subr.mxu0 0.0
        %539 = vmatpush1.msra.mxu0 0.0
        %540 = vmatprep.subr.mxu0 0.0
        %541 = vmatpush1.msra.mxu0 0.0
        %542 = vmatprep.subr.mxu0 0.0
        %543 = vmatpush1.msra.mxu0 0.0
        %544 = vmatprep.subr.mxu0 0.0
        %545 = vmatpush1.msra.mxu0 0.0
        %546 = vmatprep.subr.mxu0 0.0
        %547 = vmatpush1.msra.mxu0 0.0
        %548 = vmatprep.subr.mxu0 0.0
        %549 = vmatpush1.msra.mxu0 0.0
        %550 = vmatprep.subr.mxu0 0.0
        %551 = vmatpush1.msra.mxu0 0.0
        %552 = vmatprep.mubr.f32.mxu0 0.0
        %553 = vmatmul.mubr.f32.gmra.mrb[0].mxu0 %v486
        %v554 = vpop.f32.mrb[0].mxu0
        %v555 = vadd.f32 %v481, %v554
        %v556 = vpop.f32.mrb[0].mxu0
        %v557 = vadd.f32 %v483, %v556
        %558 = vdwg.mxu0
        %s559 = sld [smem:[#allocation2 + $0x2]]
        %v560 = vmul.f32 %v257, %v257
        %v561 = vmul.f32 %v258, %v258
        %v562 = vmul.f32 %v259, %v259
        %v563 = vmul.f32 %v260, %v260
        %v564 = vmul.f32 %v261, %v261
        %v565 = vmul.f32 %v262, %v262
        %v566 = vmul.f32 %v263, %v263
        %v567 = vmul.f32 %v264, %v264
        %v568 = vmul.f32 %v265, %v265
        %v569 = vmul.f32 %v266, %v266
        %v570 = vstv %s559
        %v571 = vsub.f32 %v560, %v570
        %v572 = vsub.f32 %v561, %v570
        %v573 = vsub.f32 %v562, %v570
        %v574 = vsub.f32 %v563, %v570
        %v575 = vsub.f32 %v564, %v570
        %v576 = vsub.f32 %v565, %v570
        %v577 = vsub.f32 %v566, %v570
        %v578 = vsub.f32 %v567, %v570
        %v579 = vsub.f32 %v568, %v570
        %v580 = vsub.f32 %v569, %v570
        %s581 = scalar_lea.vmem [#allocation7], 16
        %v582 = vld [vmem:[%s581] sm:$0xff]
        %v583 = vxor.u32 %v571, 2147483648
        %v584 = vxor.u32 %v572, 2147483648
        %v585 = vxor.u32 %v573, 2147483648
        %v586 = vxor.u32 %v574, 2147483648
        %v587 = vxor.u32 %v575, 2147483648
        %v588 = vxor.u32 %v576, 2147483648
        %v589 = vxor.u32 %v577, 2147483648
        %v590 = vxor.u32 %v578, 2147483648
        %v591 = vxor.u32 %v579, 2147483648
        %v592 = vxor.u32 %v580, 2147483648
        %v593 = vmul.f32 %v583, 1.442695
        %v594 = vpow.pop %v593
        %v595 = vmul.f32 %v584, 1.442695
        %v596 = vpow.pop %v595
        %v597 = vmul.f32 %v585, 1.442695
        %v598 = vpow.pop %v597
        %v599 = vmul.f32 %v586, 1.442695
        %v600 = vpow.pop %v599
        %v601 = vmul.f32 %v587, 1.442695
        %v602 = vpow.pop %v601
        %v603 = vmul.f32 %v588, 1.442695
        %v604 = vpow.pop %v603
        %v605 = vmul.f32 %v589, 1.442695
        %v606 = vpow.pop %v605
        %v607 = vmul.f32 %v590, 1.442695
        %v608 = vpow.pop %v607
        %v609 = vmul.f32 %v591, 1.442695
        %v610 = vpow.pop %v609
        %v611 = vmul.f32 %v592, 1.442695
        %v612 = vpow.pop %v611
        %v613 = vadd.f32 %v594, 1.0
        %v614 = vadd.f32 %v596, 1.0
        %v615 = vadd.f32 %v598, 1.0
        %v616 = vadd.f32 %v600, 1.0
        %v617 = vadd.f32 %v602, 1.0
        %v618 = vadd.f32 %v604, 1.0
        %v619 = vadd.f32 %v606, 1.0
        %v620 = vadd.f32 %v608, 1.0
        %v621 = vadd.f32 %v610, 1.0
        %v622 = vadd.f32 %v612, 1.0
        %v623 = vrcp.pop %v613
        %v624 = vmul.f32 1.0, %v623
        %v625 = vrcp.pop %v614
        %v626 = vmul.f32 1.0, %v625
        %v627 = vrcp.pop %v615
        %v628 = vmul.f32 1.0, %v627
        %v629 = vrcp.pop %v616
        %v630 = vmul.f32 1.0, %v629
        %v631 = vrcp.pop %v617
        %v632 = vmul.f32 1.0, %v631
        %v633 = vrcp.pop %v618
        %v634 = vmul.f32 1.0, %v633
        %v635 = vrcp.pop %v619
        %v636 = vmul.f32 1.0, %v635
        %v637 = vrcp.pop %v620
        %v638 = vmul.f32 1.0, %v637
        %v639 = vrcp.pop %v621
        %v640 = vmul.f32 1.0, %v639
        %v641 = vrcp.pop %v622
        %v642 = vmul.f32 1.0, %v641
        %v643 = vmul.f32 %v571, %v624
        %v644 = vmul.f32 %v572, %v626
        %v645 = vmul.f32 %v573, %v628
        %v646 = vmul.f32 %v574, %v630
        %v647 = vmul.f32 %v575, %v632
        %v648 = vmul.f32 %v576, %v634
        %v649 = vmul.f32 %v577, %v636
        %v650 = vmul.f32 %v578, %v638
        %v651 = vmul.f32 %v579, %v640
        %v652 = vmul.f32 %v580, %v642
        %v654 = vsel %vm410, %v582, 0
        %656 = vmatprep.subr.mxu0 %v644
        %657 = vmatpush1.msra.mxu0 %v643
        %658 = vmatprep.subr.mxu0 %v646
        %659 = vmatpush1.msra.mxu0 %v645
        %660 = vmatprep.subr.mxu0 %v648
        %661 = vmatpush1.msra.mxu0 %v647
        %662 = vmatprep.subr.mxu0 %v650
        %663 = vmatpush1.msra.mxu0 %v649
        %664 = vmatprep.subr.mxu0 %v652
        %665 = vmatpush1.msra.mxu0 %v651
        %666 = vmatprep.subr.mxu0 0.0
        %667 = vmatpush1.msra.mxu0 0.0
        %668 = vmatprep.subr.mxu0 0.0
        %669 = vmatpush1.msra.mxu0 0.0
        %670 = vmatprep.subr.mxu0 0.0
        %671 = vmatpush1.msra.mxu0 0.0
        %672 = vmatprep.subr.mxu0 0.0
        %673 = vmatpush1.msra.mxu0 0.0
        %674 = vmatprep.subr.mxu0 0.0
        %675 = vmatpush1.msra.mxu0 0.0
        %676 = vmatprep.subr.mxu0 0.0
        %677 = vmatpush1.msra.mxu0 0.0
        %678 = vmatprep.subr.mxu0 0.0
        %679 = vmatpush1.msra.mxu0 0.0
        %680 = vmatprep.subr.mxu0 0.0
        %681 = vmatpush1.msra.mxu0 0.0
        %682 = vmatprep.subr.mxu0 0.0
        %683 = vmatpush1.msra.mxu0 0.0
        %684 = vmatprep.subr.mxu0 0.0
        %685 = vmatpush1.msra.mxu0 0.0
        %686 = vmatprep.subr.mxu0 0.0
        %687 = vmatpush1.msra.mxu0 0.0
        %688 = vmatprep.subr.mxu0 0.0
        %689 = vmatpush1.msra.mxu0 0.0
        %690 = vmatprep.subr.mxu0 0.0
        %691 = vmatpush1.msra.mxu0 0.0
        %692 = vmatprep.subr.mxu0 0.0
        %693 = vmatpush1.msra.mxu0 0.0
        %694 = vmatprep.subr.mxu0 0.0
        %695 = vmatpush1.msra.mxu0 0.0
        %696 = vmatprep.subr.mxu0 0.0
        %697 = vmatpush1.msra.mxu0 0.0
        %698 = vmatprep.subr.mxu0 0.0
        %699 = vmatpush1.msra.mxu0 0.0
        %700 = vmatprep.subr.mxu0 0.0
        %701 = vmatpush1.msra.mxu0 0.0
        %702 = vmatprep.subr.mxu0 0.0
        %703 = vmatpush1.msra.mxu0 0.0
        %704 = vmatprep.subr.mxu0 0.0
        %705 = vmatpush1.msra.mxu0 0.0
        %706 = vmatprep.subr.mxu0 0.0
        %707 = vmatpush1.msra.mxu0 0.0
        %708 = vmatprep.subr.mxu0 0.0
        %709 = vmatpush1.msra.mxu0 0.0
        %710 = vmatprep.subr.mxu0 0.0
        %711 = vmatpush1.msra.mxu0 0.0
        %712 = vmatprep.subr.mxu0 0.0
        %713 = vmatpush1.msra.mxu0 0.0
        %714 = vmatprep.subr.mxu0 0.0
        %715 = vmatpush1.msra.mxu0 0.0
        %716 = vmatprep.subr.mxu0 0.0
        %717 = vmatpush1.msra.mxu0 0.0
        %718 = vmatprep.subr.mxu0 0.0
        %719 = vmatpush1.msra.mxu0 0.0
        %720 = vmatprep.mubr.f32.mxu0 0.0
        %721 = vmatmul.mubr.f32.gmra.mrb[0].mxu0 %v654
        %v722 = vpop.f32.mrb[0].mxu0
        %v723 = vadd.f32 0.0, %v722
        %v724 = vpop.f32.mrb[0].mxu0
        %v725 = vadd.f32 0.0, %v724
        %726 = vdwg.mxu0
        %v727 = vadd.f32 %v555, %v723
        %v728 = vadd.f32 %v557, %v725
        %s729 = sld [smem:[#allocation2 + $0x3]]
        %v730 = vmul.f32 %v257, %v571
        %v731 = vmul.f32 %v258, %v572
        %v732 = vmul.f32 %v259, %v573
        %v733 = vmul.f32 %v260, %v574
        %v734 = vmul.f32 %v261, %v575
        %v735 = vmul.f32 %v262, %v576
        %v736 = vmul.f32 %v263, %v577
        %v737 = vmul.f32 %v264, %v578
        %v738 = vmul.f32 %v265, %v579
        %v739 = vmul.f32 %v266, %v580
        %v740 = vstv %s729
        %v741 = vmul.f32 %v740, %v257
        %v742 = vmul.f32 %v740, %v258
        %v743 = vmul.f32 %v740, %v259
        %v744 = vmul.f32 %v740, %v260
        %v745 = vmul.f32 %v740, %v261
        %v746 = vmul.f32 %v740, %v262
        %v747 = vmul.f32 %v740, %v263
        %v748 = vmul.f32 %v740, %v264
        %v749 = vmul.f32 %v740, %v265
        %v750 = vmul.f32 %v740, %v266
        %v751 = vsub.f32 %v730, %v741
        %v752 = vsub.f32 %v731, %v742
        %v753 = vsub.f32 %v732, %v743
        %v754 = vsub.f32 %v733, %v744
        %v755 = vsub.f32 %v734, %v745
        %v756 = vsub.f32 %v735, %v746
        %v757 = vsub.f32 %v736, %v747
        %v758 = vsub.f32 %v737, %v748
        %v759 = vsub.f32 %v738, %v749
        %v760 = vsub.f32 %v739, %v750
        %s761 = scalar_lea.vmem [#allocation7], 24
        %v762 = vld [vmem:[%s761] sm:$0xff]
        %v763 = vxor.u32 %v751, 2147483648
        %v764 = vxor.u32 %v752, 2147483648
        %v765 = vxor.u32 %v753, 2147483648
        %v766 = vxor.u32 %v754, 2147483648
        %v767 = vxor.u32 %v755, 2147483648
        %v768 = vxor.u32 %v756, 2147483648
        %v769 = vxor.u32 %v757, 2147483648
        %v770 = vxor.u32 %v758, 2147483648
        %v771 = vxor.u32 %v759, 2147483648
        %v772 = vxor.u32 %v760, 2147483648
        %v773 = vmul.f32 %v763, 1.442695
        %v774 = vpow.pop %v773
        %v775 = vmul.f32 %v764, 1.442695
        %v776 = vpow.pop %v775
        %v777 = vmul.f32 %v765, 1.442695
        %v778 = vpow.pop %v777
        %v779 = vmul.f32 %v766, 1.442695
        %v780 = vpow.pop %v779
        %v781 = vmul.f32 %v767, 1.442695
        %v782 = vpow.pop %v781
        %v783 = vmul.f32 %v768, 1.442695
        %v784 = vpow.pop %v783
        %v785 = vmul.f32 %v769, 1.442695
        %v786 = vpow.pop %v785
        %v787 = vmul.f32 %v770, 1.442695
        %v788 = vpow.pop %v787
        %v789 = vmul.f32 %v771, 1.442695
        %v790 = vpow.pop %v789
        %v791 = vmul.f32 %v772, 1.442695
        %v792 = vpow.pop %v791
        %v793 = vadd.f32 %v774, 1.0
        %v794 = vadd.f32 %v776, 1.0
        %v795 = vadd.f32 %v778, 1.0
        %v796 = vadd.f32 %v780, 1.0
        %v797 = vadd.f32 %v782, 1.0
        %v798 = vadd.f32 %v784, 1.0
        %v799 = vadd.f32 %v786, 1.0
        %v800 = vadd.f32 %v788, 1.0
        %v801 = vadd.f32 %v790, 1.0
        %v802 = vadd.f32 %v792, 1.0
        %v803 = vrcp.pop %v793
        %v804 = vmul.f32 1.0, %v803
        %v805 = vrcp.pop %v794
        %v806 = vmul.f32 1.0, %v805
        %v807 = vrcp.pop %v795
        %v808 = vmul.f32 1.0, %v807
        %v809 = vrcp.pop %v796
        %v810 = vmul.f32 1.0, %v809
        %v811 = vrcp.pop %v797
        %v812 = vmul.f32 1.0, %v811
        %v813 = vrcp.pop %v798
        %v814 = vmul.f32 1.0, %v813
        %v815 = vrcp.pop %v799
        %v816 = vmul.f32 1.0, %v815
        %v817 = vrcp.pop %v800
        %v818 = vmul.f32 1.0, %v817
        %v819 = vrcp.pop %v801
        %v820 = vmul.f32 1.0, %v819
        %v821 = vrcp.pop %v802
        %v822 = vmul.f32 1.0, %v821
        %v823 = vmul.f32 %v751, %v804
        %v824 = vmul.f32 %v752, %v806
        %v825 = vmul.f32 %v753, %v808
        %v826 = vmul.f32 %v754, %v810
        %v827 = vmul.f32 %v755, %v812
        %v828 = vmul.f32 %v756, %v814
        %v829 = vmul.f32 %v757, %v816
        %v830 = vmul.f32 %v758, %v818
        %v831 = vmul.f32 %v759, %v820
        %v832 = vmul.f32 %v760, %v822
        %v834 = vsel %vm410, %v762, 0
        %836 = vmatprep.subr.mxu0 %v824
        %837 = vmatpush1.msra.mxu0 %v823
        %838 = vmatprep.subr.mxu0 %v826
        %839 = vmatpush1.msra.mxu0 %v825
        %840 = vmatprep.subr.mxu0 %v828
        %841 = vmatpush1.msra.mxu0 %v827
        %842 = vmatprep.subr.mxu0 %v830
        %843 = vmatpush1.msra.mxu0 %v829
        %844 = vmatprep.subr.mxu0 %v832
        %845 = vmatpush1.msra.mxu0 %v831
        %846 = vmatprep.subr.mxu0 0.0
        %847 = vmatpush1.msra.mxu0 0.0
        %848 = vmatprep.subr.mxu0 0.0
        %849 = vmatpush1.msra.mxu0 0.0
        %850 = vmatprep.subr.mxu0 0.0
        %851 = vmatpush1.msra.mxu0 0.0
        %852 = vmatprep.subr.mxu0 0.0
        %853 = vmatpush1.msra.mxu0 0.0
        %854 = vmatprep.subr.mxu0 0.0
        %855 = vmatpush1.msra.mxu0 0.0
        %856 = vmatprep.subr.mxu0 0.0
        %857 = vmatpush1.msra.mxu0 0.0
        %858 = vmatprep.subr.mxu0 0.0
        %859 = vmatpush1.msra.mxu0 0.0
        %860 = vmatprep.subr.mxu0 0.0
        %861 = vmatpush1.msra.mxu0 0.0
        %862 = vmatprep.subr.mxu0 0.0
        %863 = vmatpush1.msra.mxu0 0.0
        %864 = vmatprep.subr.mxu0 0.0
        %865 = vmatpush1.msra.mxu0 0.0
        %866 = vmatprep.subr.mxu0 0.0
        %867 = vmatpush1.msra.mxu0 0.0
        %868 = vmatprep.subr.mxu0 0.0
        %869 = vmatpush1.msra.mxu0 0.0
        %870 = vmatprep.subr.mxu0 0.0
        %871 = vmatpush1.msra.mxu0 0.0
        %872 = vmatprep.subr.mxu0 0.0
        %873 = vmatpush1.msra.mxu0 0.0
        %874 = vmatprep.subr.mxu0 0.0
        %875 = vmatpush1.msra.mxu0 0.0
        %876 = vmatprep.subr.mxu0 0.0
        %877 = vmatpush1.msra.mxu0 0.0
        %878 = vmatprep.subr.mxu0 0.0
        %879 = vmatpush1.msra.mxu0 0.0
        %880 = vmatprep.subr.mxu0 0.0
        %881 = vmatpush1.msra.mxu0 0.0
        %882 = vmatprep.subr.mxu0 0.0
        %883 = vmatpush1.msra.mxu0 0.0
        %884 = vmatprep.subr.mxu0 0.0
        %885 = vmatpush1.msra.mxu0 0.0
        %886 = vmatprep.subr.mxu0 0.0
        %887 = vmatpush1.msra.mxu0 0.0
        %888 = vmatprep.subr.mxu0 0.0
        %889 = vmatpush1.msra.mxu0 0.0
        %890 = vmatprep.subr.mxu0 0.0
        %891 = vmatpush1.msra.mxu0 0.0
        %892 = vmatprep.subr.mxu0 0.0
        %893 = vmatpush1.msra.mxu0 0.0
        %894 = vmatprep.subr.mxu0 0.0
        %895 = vmatpush1.msra.mxu0 0.0
        %896 = vmatprep.subr.mxu0 0.0
        %897 = vmatpush1.msra.mxu0 0.0
        %898 = vmatprep.subr.mxu0 0.0
        %899 = vmatpush1.msra.mxu0 0.0
        %900 = vmatprep.mubr.f32.mxu0 0.0
        %901 = vmatmul.mubr.f32.gmra.mrb[0].mxu0 %v834
        %v902 = vpop.f32.mrb[0].mxu0
        %v903 = vadd.f32 0.0, %v902
        %v904 = vpop.f32.mrb[0].mxu0
        %v905 = vadd.f32 0.0, %v904
        %906 = vdwg.mxu0
        %v907 = vadd.f32 %v727, %v903
        %v908 = vadd.f32 %v728, %v905
        %v909 = vld [vmem:[%s3] sm:$0xff]
        %911 = vset.pattern.permute.xlu0 0
        %912 = vperm.xlu0 %911, %v909
        %v913 = vpop.permute.xlu0 %912
        %v915 = vadd.f32 %v907, %v913
        %v916 = vadd.f32 %v908, %v913
        %v917 = vxor.u32 %v915, 2147483648
        %v918 = vxor.u32 %v916, 2147483648
        %v919 = vmul.f32 %v917, 1.442695
        %v920 = vpow.pop %v919
        %v921 = vmul.f32 %v918, 1.442695
        %v922 = vpow.pop %v921
        %v923 = vadd.f32 %v920, 1.0
        %v924 = vadd.f32 %v922, 1.0
        %v925 = vrcp.pop %v923
        %v926 = vmul.f32 1.0, %v925
        %v927 = vrcp.pop %v924
        %v928 = vmul.f32 1.0, %v927
        %v929 = vmul.f32 %v915, %v926
        %v930 = vmul.f32 %v916, %v928
        %931 = vst [vmem:[%s244] sm:$0xff] %v929
        %932 = vst [vmem:[%s244 + $0x8] sm:$0xff] %v930
        %s933 = sand.u32 %s120, 1
        %s934 = scalar_lea.sflag [#allocation4], %s933
        %s935 = sand.u32 %s120, 1
        %s936 = smul.addr %s935, 16
        %s937 = scalar_lea.vmem [#allocation9], %s936
        // Predicated region
        $region49: #{tpu_custom_call.1} parent=35 // pred_check
          %p938 = pneg %p130
        $region50: #{tpu_custom_call.1} parent=35 // pred_check_branch
          %940 = sbr.rel (%p938) target = $region52
        $region51: #{tpu_custom_call.1} parent=35 // pred_region
          %s941 = smul.u32 2, %s23
          %s943 = ssub.s32 256, 256
          %944 = vsyncadd %s934, %s943
          %s945 = smul.addr %s941, 128
          %s946 = scalar_lea.hbm %s4, %s945
          %s948 = sshll.u32 %s937, 4
          %s949 = int_to_ptr.vmem [resolvable:$true] %s948
          %951 = dma.vmem_to_hbm [thread:$0]  %s949, 256, %s946, %s934
        $region52: #{tpu_custom_call.1} parent=35 // pred_fallthru
          _
      $region36: #{tpu_custom_call.1} parent=5 // pred_fallthru
        _
      %p952 = scmp.le.s32.totalorder 2, %s18
      // Predicated region
      $region53: #{tpu_custom_call.1} parent=5 // pred_check
        %p953 = pneg %p952
      $region54: #{tpu_custom_call.1} parent=5 // pred_check_branch
        %955 = sbr.rel (%p953) target = $region56
      $region55: #{tpu_custom_call.1} parent=5 // pred_region
        %s956 = ssub.s32 %s18, 2
        // Predicated region
        $region57: #{tpu_custom_call.1} parent=55 // pred_check
          %p957 = pneg %p136
        $region58: #{tpu_custom_call.1} parent=55 // pred_check_branch
          %959 = sbr.rel (%p957) target = $region60
        $region59: #{tpu_custom_call.1} parent=55 // pred_region
          %s960 = sand.u32 %s121, 1
          %s961 = scalar_lea.sflag [#allocation4], %s960
          %s962 = sand.u32 %s121, 1
          %s963 = smul.addr %s962, 16
          %s964 = scalar_lea.vmem [#allocation9], %s963
          %965 = dma.done %s961, 256
        $region60: #{tpu_custom_call.1} parent=55 // pred_fallthru
          _
      $region56: #{tpu_custom_call.1} parent=5 // pred_fallthru
        _
    $region6: #{tpu_custom_call.1} parent=1 // loop_footer
      %s22 = sadd.s32 1, %s18
    $region7: #{tpu_custom_call.1} parent=1 // loop_footer_branch
      %17 = sbr.rel target = $region3
    $region8: #{tpu_custom_call.1} parent=1 // loop_exit
      _
    %966 = vsyncpa [#allocation3], 1
    %s967 = scalar_lea.sflag [#allocation3], 1
    %968 = vsyncpa %s967, 1
    %969 = vsyncpa [#allocation8], 1
    %970 = vsyncpa [#allocation4], 1
    %s971 = scalar_lea.sflag [#allocation4], 1
    %972 = vsyncpa %s971, 1
    %973 = vsyncpa [#allocation5], 1
    %s974 = scalar_lea.sflag [#allocation5], 1
    %975 = vsyncpa %s974, 1

</llo_original>
